<compile_context>
chip_gen: v5e
topology: v5e:2x2
jax: 0.10.0
libtpu: 0.0.40
codegen_flags: <defaults>
</compile_context>

<pallas_src>
import jax
import jax.numpy as jnp
from jax import lax
from jax.experimental import pallas as pl
from jax.experimental.pallas import tpu as pltpu


def _mlp_kernel(x_ref, w1_ref, b1_ref, w2_ref, b2_ref, o_ref):
    # x:(TB,D) bf16/f32, w1:(D,H) bf16/f32, b1:(1,H) f32, w2:(1,H) f32,
    # b2:(1,1) f32 in SMEM, o:(1,TB) f32 (one batch element per lane).
    # Layer 1 on the MXU with f32 accumulation; bias + ReLU on the VPU in f32.
    h = jnp.dot(x_ref[...], w1_ref[...], preferred_element_type=jnp.float32)
    h = jnp.maximum(h + b1_ref[...], 0.0)                       # (TB, H) f32
    # Layer 2 (output width 1): contract over H with the batch on the lane axis
    # -> lane-dense (1, TB) result (same "A @ B^T" pattern as attention scores).
    z = lax.dot_general(
        w2_ref[...], h,
        dimension_numbers=(((1,), (1,)), ((), ())),
        preferred_element_type=jnp.float32) + b2_ref[0, 0]      # (1, TB) f32
    # Sigmoid: exp and the approximate reciprocal both run on the EUP slot.
    o_ref[...] = pl.reciprocal(1.0 + jnp.exp(-z), approx=True).astype(o_ref.dtype)


def _round_up(n, m):
    return ((n + m - 1) // m) * m


def neural_net1_forward(x, w1, b1, w2, b2, *, block_b=512,
                        compute_dtype=jnp.bfloat16):
    """Forward pass of NeuralNet1. Returns sigmoid(relu(x@w1+b1)@w2.T+b2), shape (B,1)."""
    B, D = x.shape
    Dw, H = w1.shape
    assert Dw == D and b1.shape == (1, H) and w2.shape == (1, H) and b2.shape == (1, 1)

    # Batch tile: multiple of 128 (lane-dense output), capped by padded batch.
    tb = min(_round_up(block_b, 128), _round_up(B, 128))
    Bp = _round_up(B, tb)
    grid = (Bp // tb,)

    x_p = x if Bp == B else jnp.pad(x, ((0, Bp - B), (0, 0)))
    # bf16 matmul operands (f32 accumulation in-kernel keeps accuracy).
    x_c = x_p.astype(compute_dtype)
    w1_c = w1.astype(compute_dtype)

    flops = 2 * Bp * D * H + 2 * Bp * H
    bytes_accessed = (x_c.size * x_c.dtype.itemsize
                      + w1_c.size * w1_c.dtype.itemsize
                      + (b1.size + w2.size + b2.size) * 4
                      + Bp * 4)

    out = pl.pallas_call(
        _mlp_kernel,
        out_shape=jax.ShapeDtypeStruct((1, Bp), jnp.float32),
        grid=grid,
        in_specs=[
            pl.BlockSpec((tb, D), lambda i: (i, 0)),   # x tile streamed per step
            pl.BlockSpec((D, H), lambda i: (0, 0)),    # w1 resident in VMEM
            pl.BlockSpec((1, H), lambda i: (0, 0)),    # b1 resident in VMEM
            pl.BlockSpec((1, H), lambda i: (0, 0)),    # w2 resident (row layout)
            pl.BlockSpec(memory_space=pltpu.SMEM),     # b2 scalar in SMEM
        ],
        out_specs=pl.BlockSpec((1, tb), lambda i: (0, i)),  # lane-dense output row
        compiler_params=pltpu.CompilerParams(
            dimension_semantics=("parallel",)),
        cost_estimate=pl.CostEstimate(
            flops=flops, transcendentals=Bp, bytes_accessed=bytes_accessed),
    )(x_c, w1_c, b1, w2, b2)

    return out[0, :B].reshape(B, 1)


def init_params(key, input_size, hidden_size):
    # Deterministic init mirroring PyTorch nn.Linear's U(-1/sqrt(fan_in), 1/sqrt(fan_in)).
    k1, k2, k3, k4 = jax.random.split(key, 4)
    bound1 = 1.0 / (input_size ** 0.5)
    bound2 = 1.0 / (hidden_size ** 0.5)
    w1 = jax.random.uniform(k1, (input_size, hidden_size), jnp.float32, -bound1, bound1)
    b1 = jax.random.uniform(k2, (1, hidden_size), jnp.float32, -bound1, bound1)
    w2 = jax.random.uniform(k3, (1, hidden_size), jnp.float32, -bound2, bound2)
    b2 = jax.random.uniform(k4, (1, 1), jnp.float32, -bound2, bound2)
    return w1, b1, w2, b2


if __name__ == "__main__":
    batch, input_size, hidden_size = 200, 32, 32   # small; 2 grid steps at block_b=128
    key = jax.random.PRNGKey(0)
    kx, kp = jax.random.split(key)
    x = jax.random.normal(kx, (batch, input_size), jnp.float32)
    w1, b1, w2, b2 = init_params(kp, input_size, hidden_size)

    y_pred = neural_net1_forward(x, w1, b1, w2, b2, block_b=128)
    jax.block_until_ready(y_pred)

    # Pure-JAX reference on the same bf16-rounded matmul inputs (kernel uses bf16
    # operands with f32 accumulation); tolerance covers the EUP approx reciprocal.
    xq = x.astype(jnp.bfloat16).astype(jnp.float32)
    w1q = w1.astype(jnp.bfloat16).astype(jnp.float32)
    h_ref = jnp.maximum(xq @ w1q + b1, 0.0)
    y_ref = jax.nn.sigmoid(h_ref @ w2.T + b2)

    assert y_pred.shape == (batch, 1)
    assert jnp.allclose(y_pred, y_ref, atol=2e-3, rtol=2e-3)

    print("KERNEL_OK")
</pallas_src>

<mosaic_0001>
module attributes {stable_mosaic.version = 11 : i64} {
  func.func @_mlp_kernel(%arg0: i32, %arg1: memref<128x32xbf16, #tpu.memory_space<vmem>>, %arg2: memref<32x32xbf16, #tpu.memory_space<vmem>>, %arg3: memref<1x32xf32, #tpu.memory_space<vmem>>, %arg4: memref<1x32xf32, #tpu.memory_space<vmem>>, %arg5: memref<1x1xf32, #tpu.memory_space<smem>>, %arg6: memref<1x128xf32, #tpu.memory_space<vmem>>) attributes {dimension_semantics = [#tpu.dimension_semantics<parallel>], iteration_bounds = array<i64: 2>, scalar_prefetch = 0 : i64, scratch_operands = 0 : i64, tpu.core_type = #tpu.core_type<tc>, window_params = [{transform_indices = @transform_0, window_bounds = array<i64: 128, 32>}, {pipeline_mode = #tpu.pipeline_mode<synchronous>, transform_indices = @transform_1, window_bounds = array<i64: 32, 32>}, {pipeline_mode = #tpu.pipeline_mode<synchronous>, transform_indices = @transform_2, window_bounds = array<i64: 1, 32>}, {pipeline_mode = #tpu.pipeline_mode<synchronous>, transform_indices = @transform_3, window_bounds = array<i64: 1, 32>}, {transform_indices = @transform_4, window_bounds = array<i64: 1, 1>}, {transform_indices = @transform_5, window_bounds = array<i64: 1, 128>}]} {
    %c0 = arith.constant 0 : index
    %c0_0 = arith.constant 0 : index
    %0 = vector.load %arg1[%c0, %c0_0] : memref<128x32xbf16, #tpu.memory_space<vmem>>, vector<128x32xbf16>
    %c0_1 = arith.constant 0 : index
    %c0_2 = arith.constant 0 : index
    %1 = vector.load %arg2[%c0_1, %c0_2] : memref<32x32xbf16, #tpu.memory_space<vmem>>, vector<32x32xbf16>
    %cst = arith.constant dense<0.000000e+00> : vector<128x32xf32>
    %2 = tpu.matmul %0, %1, %cst {dimension_numbers = #tpu.dot_dimension_numbers<[1], [0], [0], [1], [0, 0, 1, 1], [], []>} : vector<128x32xbf16>, vector<32x32xbf16>, vector<128x32xf32> -> vector<128x32xf32>
    %c0_3 = arith.constant 0 : index
    %c0_4 = arith.constant 0 : index
    %3 = vector.load %arg3[%c0_3, %c0_4] : memref<1x32xf32, #tpu.memory_space<vmem>>, vector<1x32xf32>
    %4 = vector.broadcast %3 : vector<1x32xf32> to vector<128x32xf32>
    %5 = arith.addf %2, %4 : vector<128x32xf32>
    %cst_5 = arith.constant 0.000000e+00 : f32
    %6 = vector.broadcast %cst_5 : f32 to vector<128x32xf32>
    %7 = arith.maximumf %5, %6 : vector<128x32xf32>
    %c0_6 = arith.constant 0 : index
    %c0_7 = arith.constant 0 : index
    %8 = vector.load %arg4[%c0_6, %c0_7] : memref<1x32xf32, #tpu.memory_space<vmem>>, vector<1x32xf32>
    %cst_8 = arith.constant dense<0.000000e+00> : vector<1x128xf32>
    %9 = tpu.matmul %8, %7, %cst_8 {dimension_numbers = #tpu.dot_dimension_numbers<[1], [1], [0], [0], [0, 0, 1, 0], [], []>} : vector<1x32xf32>, vector<128x32xf32>, vector<1x128xf32> -> vector<1x128xf32>
    %c0_9 = arith.constant 0 : index
    %c0_10 = arith.constant 0 : index
    %10 = memref.load %arg5[%c0_9, %c0_10] : memref<1x1xf32, #tpu.memory_space<smem>>
    %11 = vector.broadcast %10 : f32 to vector<1x128xf32>
    %12 = arith.addf %9, %11 : vector<1x128xf32>
    %cst_11 = arith.constant 0.000000e+00 : f32
    %13 = vector.broadcast %cst_11 : f32 to vector<1x128xf32>
    %14 = arith.subf %13, %12 : vector<1x128xf32>
    %15 = math.exp %14 : vector<1x128xf32>
    %cst_12 = arith.constant 1.000000e+00 : f32
    %16 = vector.broadcast %cst_12 : f32 to vector<1x128xf32>
    %17 = arith.addf %16, %15 : vector<1x128xf32>
    %18 = tpu.reciprocal %17 {approx = true} : vector<1x128xf32> -> vector<1x128xf32>
    %c0_13 = arith.constant 0 : index
    %c0_14 = arith.constant 0 : index
    %19 = vector.load %arg6[%c0_13, %c0_14] : memref<1x128xf32, #tpu.memory_space<vmem>>, vector<1x128xf32>
    tpu.vector_store %arg6[%c0_13, %c0_14], %18 {strides = array<i32>} : memref<1x128xf32, #tpu.memory_space<vmem>>, vector<1x128xf32>,
    return
  }
  func.func @transform_0(%arg0: i32) -> (i32, i32) {
    %c0_i32 = arith.constant 0 : i32
    %c0_i32_0 = arith.constant 0 : i32
    return %arg0, %c0_i32 : i32, i32
  }
  func.func @transform_1(%arg0: i32) -> (i32, i32) {
    %c0_i32 = arith.constant 0 : i32
    %c0_i32_0 = arith.constant 0 : i32
    %c0_i32_1 = arith.constant 0 : i32
    return %c0_i32, %c0_i32_0 : i32, i32
  }
  func.func @transform_2(%arg0: i32) -> (i32, i32) {
    %c0_i32 = arith.constant 0 : i32
    %c0_i32_0 = arith.constant 0 : i32
    %c0_i32_1 = arith.constant 0 : i32
    return %c0_i32, %c0_i32_0 : i32, i32
  }
  func.func @transform_3(%arg0: i32) -> (i32, i32) {
    %c0_i32 = arith.constant 0 : i32
    %c0_i32_0 = arith.constant 0 : i32
    %c0_i32_1 = arith.constant 0 : i32
    return %c0_i32, %c0_i32_0 : i32, i32
  }
  func.func @transform_4(%arg0: i32) -> (i32, i32) {
    %c0_i32 = arith.constant 0 : i32
    %c0_i32_0 = arith.constant 0 : i32
    %c0_i32_1 = arith.constant 0 : i32
    return %c0_i32, %c0_i32_0 : i32, i32
  }
  func.func @transform_5(%arg0: i32) -> (i32, i32) {
    %c0_i32 = arith.constant 0 : i32
    %c0_i32_0 = arith.constant 0 : i32
    return %c0_i32, %arg0 : i32, i32
  }
}

</mosaic_0001>

<llo_original>
// kernel: tpu_custom_call.1
$region0: #{tpu_custom_call.1}
  #allocation0 [shape = 'u32[]', space=smem, size = 0x4, offset = 0x4, fixed_abs, tag = 'smem constant byte address 0x4 - core index']
  #allocation1 [shape = 'u32[72,128]{1,0:T(1,128)}', space=vmem, size = 0x9000, scoped, tag = 'internal scratch']
  #allocation2 [shape = 'f32[1,1]{1,0:T(1,128)S(6)}', space=smem, size = 0x200, scoped, tag = 'scoped memory for tpu_custom_call.1']
  %s0 = inlined_call_operand.vmem [shape: bf16[256,32], index: 0, kind: input, shape index: {}]
  %s1 = inlined_call_operand.vmem [shape: bf16[32,32], index: 1, kind: input, shape index: {}]
  %s2 = inlined_call_operand.vmem [shape: f32[1,32], index: 2, kind: input, shape index: {}]
  %s3 = inlined_call_operand.vmem [shape: f32[1,32], index: 3, kind: input, shape index: {}]
  %s4 = inlined_call_operand.<no memory space> [shape: f32[1,1], index: 4, kind: input, shape index: {}]
  %s5 = inlined_call_operand.hbm [shape: f32[1,256], index: 5, kind: output, shape index: {}]
  %s6 = sld [smem:[#allocation0]]
  $region53: #{tpu_custom_call.1} parent=0
    _
  %s8 = ssub.s32 1, %s6
  %s9 = scalar_select 0, %s8, %s6
  %10 = sst [smem:[#allocation2]] %s4
  $region1: #{tpu_custom_call.1} parent=0
    #allocation3 [shape = 'u8[1024]{0}', space=vmem, size = 0x400, scoped, tag = 'output window, operand 0']
    #allocation4 [shape = 's32[2]{0}', space=sflag, size = 0x8, scoped, tag = 'scoped memory for tpu_custom_call.1']
    %11 = vsyncpa [#allocation4], 0
    %s12 = scalar_lea.sflag [#allocation4], 1
    %13 = vsyncpa %s12, 0
    loop: start=0, step=1, limit=4
    $region2: #{tpu_custom_call.1} parent=1 // loop_pre_header
      _
    $region3: #{tpu_custom_call.1} parent=1 // loop_header
      %s15 = sphi 0, %s19
      %p16 = scmp.ge.s32.totalorder %s15, 4
      %s25 = sphi 0, %s27
      %s28 = sphi 0, %s25
      %s29 = sphi 0, %s28
      %s45 = sphi 0, %s29
      %s49 = sphi 0, %s49
      %s51 = sphi 0, %s49
      %s52 = sphi 0, %s51
      %s66 = sphi 0, %s52
      %s70 = sphi 0, %s70
      %s72 = sphi 0, %s70
      %s73 = sphi 0, %s72
      %s87 = sphi 0, %s73
      %s91 = sphi 0, %s91
      %s93 = sphi 0, %s91
      %s94 = sphi 0, %s93
      %s108 = sphi 0, %s94
      %s112 = sphi 0, %s112
      %s114 = sphi 0, %s112
      %s115 = sphi 0, %s114
      %s129 = sphi 0, %s115
      %s135 = sphi 0, %s137
      %s138 = sphi 0, %s135
      %s139 = sphi 0, %s138
      %s155 = sphi 0, %s139
    $region4: #{tpu_custom_call.1} parent=1 // loop_header_branch
      %18 = sbr.rel (%p16) target = $region8
    $region5: #{tpu_custom_call.1} parent=1 // loop_body
      %s20 = ssub.s32 %s15, 1
      %s21 = ssub.s32 %s15, 2
      %s22 = sadd.s32 %s15, 1
      %s23 = ssub.s32 %s15, %s22
      %p24 = scmp.eq.s32.totalorder %s23, 0
      %s26 = sadd.s32 %s25, 1
      %s27 = scalar_select %p24, %s25, %s26
      %p30 = pneg %p24
      %p31 = scmp.eq.s32.totalorder %s15, 1
      %p32 = por %p30, %p31
      %p33 = scmp.ne.s32.totalorder %s25, %s28
      %p34 = scmp.eq.s32.totalorder %s15, 0
      %p35 = por %p33, %p34
      %p36 = scmp.ne.s32.totalorder %s25, %s28
      %p37 = scmp.eq.s32.totalorder %s20, 1
      %p38 = por %p36, %p37
      %p39 = scmp.ne.s32.totalorder %s28, %s29
      %p40 = scmp.eq.s32.totalorder %s20, 0
      %p41 = por %p39, %p40
      %p42 = scmp.ne.s32.totalorder %s28, %s29
      %p43 = scmp.eq.s32.totalorder %s21, 1
      %p44 = por %p42, %p43
      %p46 = scmp.ne.s32.totalorder %s29, %s45
      %p47 = scmp.eq.s32.totalorder %s21, 0
      %p48 = por %p46, %p47
      %s50 = sadd.s32 %s49, 1
      %p53 = scmp.eq.s32.totalorder %s15, 1
      %p54 = scmp.ne.s32.totalorder %s49, %s51
      %p55 = scmp.eq.s32.totalorder %s15, 0
      %p56 = por %p54, %p55
      %p57 = scmp.ne.s32.totalorder %s49, %s51
      %p58 = scmp.eq.s32.totalorder %s20, 1
      %p59 = por %p57, %p58
      %p60 = scmp.ne.s32.totalorder %s51, %s52
      %p61 = scmp.eq.s32.totalorder %s20, 0
      %p62 = por %p60, %p61
      %p63 = scmp.ne.s32.totalorder %s51, %s52
      %p64 = scmp.eq.s32.totalorder %s21, 1
      %p65 = por %p63, %p64
      %p67 = scmp.ne.s32.totalorder %s52, %s66
      %p68 = scmp.eq.s32.totalorder %s21, 0
      %p69 = por %p67, %p68
      %s71 = sadd.s32 %s70, 1
      %p74 = scmp.eq.s32.totalorder %s15, 1
      %p75 = scmp.ne.s32.totalorder %s70, %s72
      %p76 = scmp.eq.s32.totalorder %s15, 0
      %p77 = por %p75, %p76
      %p78 = scmp.ne.s32.totalorder %s70, %s72
      %p79 = scmp.eq.s32.totalorder %s20, 1
      %p80 = por %p78, %p79
      %p81 = scmp.ne.s32.totalorder %s72, %s73
      %p82 = scmp.eq.s32.totalorder %s20, 0
      %p83 = por %p81, %p82
      %p84 = scmp.ne.s32.totalorder %s72, %s73
      %p85 = scmp.eq.s32.totalorder %s21, 1
      %p86 = por %p84, %p85
      %p88 = scmp.ne.s32.totalorder %s73, %s87
      %p89 = scmp.eq.s32.totalorder %s21, 0
      %p90 = por %p88, %p89
      %s92 = sadd.s32 %s91, 1
      %p95 = scmp.eq.s32.totalorder %s15, 1
      %p96 = scmp.ne.s32.totalorder %s91, %s93
      %p97 = scmp.eq.s32.totalorder %s15, 0
      %p98 = por %p96, %p97
      %p99 = scmp.ne.s32.totalorder %s91, %s93
      %p100 = scmp.eq.s32.totalorder %s20, 1
      %p101 = por %p99, %p100
      %p102 = scmp.ne.s32.totalorder %s93, %s94
      %p103 = scmp.eq.s32.totalorder %s20, 0
      %p104 = por %p102, %p103
      %p105 = scmp.ne.s32.totalorder %s93, %s94
      %p106 = scmp.eq.s32.totalorder %s21, 1
      %p107 = por %p105, %p106
      %p109 = scmp.ne.s32.totalorder %s94, %s108
      %p110 = scmp.eq.s32.totalorder %s21, 0
      %p111 = por %p109, %p110
      %s113 = sadd.s32 %s112, 1
      %p116 = scmp.eq.s32.totalorder %s15, 1
      %p117 = scmp.ne.s32.totalorder %s112, %s114
      %p118 = scmp.eq.s32.totalorder %s15, 0
      %p119 = por %p117, %p118
      %p120 = scmp.ne.s32.totalorder %s112, %s114
      %p121 = scmp.eq.s32.totalorder %s20, 1
      %p122 = por %p120, %p121
      %p123 = scmp.ne.s32.totalorder %s114, %s115
      %p124 = scmp.eq.s32.totalorder %s20, 0
      %p125 = por %p123, %p124
      %p126 = scmp.ne.s32.totalorder %s114, %s115
      %p127 = scmp.eq.s32.totalorder %s21, 1
      %p128 = por %p126, %p127
      %p130 = scmp.ne.s32.totalorder %s115, %s129
      %p131 = scmp.eq.s32.totalorder %s21, 0
      %p132 = por %p130, %p131
      %s133 = ssub.s32 %s15, %s22
      %p134 = scmp.eq.s32.totalorder %s133, 0
      %s136 = sadd.s32 %s135, 1
      %s137 = scalar_select %p134, %s135, %s136
      %p140 = pneg %p134
      %p141 = scmp.eq.s32.totalorder %s15, 1
      %p142 = por %p140, %p141
      %p143 = scmp.ne.s32.totalorder %s135, %s138
      %p144 = scmp.eq.s32.totalorder %s15, 0
      %p145 = por %p143, %p144
      %p146 = scmp.ne.s32.totalorder %s135, %s138
      %p147 = scmp.eq.s32.totalorder %s20, 1
      %p148 = por %p146, %p147
      %p149 = scmp.ne.s32.totalorder %s138, %s139
      %p150 = scmp.eq.s32.totalorder %s20, 0
      %p151 = por %p149, %p150
      %p152 = scmp.ne.s32.totalorder %s138, %s139
      %p153 = scmp.eq.s32.totalorder %s21, 1
      %p154 = por %p152, %p153
      %p156 = scmp.ne.s32.totalorder %s139, %s155
      %p157 = scmp.eq.s32.totalorder %s21, 0
      %p158 = por %p156, %p157
      %p159 = scmp.le.s32.totalorder 1, %s15
      %p160 = scmp.lt.s32.totalorder %s15, 3
      %p161 = pnand %p159, %p160
      %p162 = pneg %p161
      // Predicated region
      $region9: #{tpu_custom_call.1} parent=5 // pred_check
        _
      $region10: #{tpu_custom_call.1} parent=5 // pred_check_branch
        %164 = sbr.rel (%p161) target = $region12
      $region11: #{tpu_custom_call.1} parent=5 // pred_region
        %s165 = ssub.s32 %s15, 1
        // Predicated region
        $region13: #{tpu_custom_call.1} parent=11 // pred_check
          %p166 = pneg %p62
        $region14: #{tpu_custom_call.1} parent=11 // pred_check_branch
          %168 = sbr.rel (%p166) target = $region16
        $region15: #{tpu_custom_call.1} parent=11 // pred_region
          _
        $region16: #{tpu_custom_call.1} parent=11 // pred_fallthru
          _
        // Predicated region
        $region17: #{tpu_custom_call.1} parent=11 // pred_check
          %p169 = pneg %p83
        $region18: #{tpu_custom_call.1} parent=11 // pred_check_branch
          %171 = sbr.rel (%p169) target = $region20
        $region19: #{tpu_custom_call.1} parent=11 // pred_region
          _
        $region20: #{tpu_custom_call.1} parent=11 // pred_fallthru
          _
        // Predicated region
        $region21: #{tpu_custom_call.1} parent=11 // pred_check
          %p172 = pneg %p104
        $region22: #{tpu_custom_call.1} parent=11 // pred_check_branch
          %174 = sbr.rel (%p172) target = $region24
        $region23: #{tpu_custom_call.1} parent=11 // pred_region
          _
        $region24: #{tpu_custom_call.1} parent=11 // pred_fallthru
          _
        // Predicated region
        $region25: #{tpu_custom_call.1} parent=11 // pred_check
          %p175 = pneg %p125
        $region26: #{tpu_custom_call.1} parent=11 // pred_check_branch
          %177 = sbr.rel (%p175) target = $region28
        $region27: #{tpu_custom_call.1} parent=11 // pred_region
          _
        $region28: #{tpu_custom_call.1} parent=11 // pred_fallthru
          _
      $region12: #{tpu_custom_call.1} parent=5 // pred_fallthru
        _
      %p178 = scmp.lt.s32.totalorder %s15, 2
      // Predicated region
      $region29: #{tpu_custom_call.1} parent=5 // pred_check
        %p179 = pneg %p178
      $region30: #{tpu_custom_call.1} parent=5 // pred_check_branch
        %181 = sbr.rel (%p179) target = $region32
      $region31: #{tpu_custom_call.1} parent=5 // pred_region
        // Predicated region
        $region33: #{tpu_custom_call.1} parent=31 // pred_check
          %p182 = pneg %p35
        $region34: #{tpu_custom_call.1} parent=31 // pred_check_branch
          %184 = sbr.rel (%p182) target = $region36
        $region35: #{tpu_custom_call.1} parent=31 // pred_region
          %s185 = smul.u32 16, %s15
          %p186 = scmp.lt.s32.totalorder %s185, 31
          %s187 = scalar_select %p186, %s185, 31
          %s188 = smul.addr %s187, 4
          %s189 = scalar_lea.vmem %s0, %s188
          %s190 = smul.u32 16, %s15
        $region36: #{tpu_custom_call.1} parent=31 // pred_fallthru
          _
      $region32: #{tpu_custom_call.1} parent=5 // pred_fallthru
        _
      %p191 = scmp.le.s32.totalorder 1, %s15
      %p192 = scmp.lt.s32.totalorder %s15, 3
      %p193 = pnand %p191, %p192
      %p194 = pneg %p193
      // Predicated region
      $region37: #{tpu_custom_call.1} parent=5 // pred_check
        _
      $region38: #{tpu_custom_call.1} parent=5 // pred_check_branch
        %196 = sbr.rel (%p193) target = $region40
      $region39: #{tpu_custom_call.1} parent=5 // pred_region
        %s197 = ssub.s32 %s15, 1
        %s198 = smul.u32 16, %s20
        %p199 = scmp.lt.s32.totalorder %s198, 31
        %s200 = scalar_select %p199, %s198, 31
        %s201 = smul.addr %s200, 4
        %s202 = scalar_lea.vmem %s0, %s201
        %p203 = pneg %p41
        %p204 = pneg %p38
        %p205 = pneg %p62
        %p206 = pneg %p59
        %p207 = pneg %p83
        %p208 = pneg %p80
        %p209 = pneg %p104
        %p210 = pneg %p101
        %p211 = pneg %p125
        %p212 = pneg %p122
        %p213 = pneg %p151
        %p214 = pneg %p148
        %s215 = sand.u32 %s138, 1
        %s216 = scalar_lea.sflag [#allocation4], %s215
        %s217 = sand.u32 %s138, 1
        %s218 = scalar_lea.vmem [#allocation3], %s217
        %s219 = smul.u32 16, %s20
        %p220 = scmp.lt.s32.totalorder %s219, 31
        %s221 = scalar_select %p220, %s219, 31
        %s222 = smul.addr %s221, 4
        %s223 = scalar_lea.vmem %s0, %s222
        %s224 = smul.u32 16, %s20
        %v226 = vld [vmem:[%s223] sm:$0xf]
        %v227 = vld [vmem:[%s223 + $0x4] sm:$0xf]
        %v228 = vld [vmem:[%s223 + $0x8] sm:$0xf]
        %v229 = vld [vmem:[%s223 + $0xc] sm:$0xf]
        %v230 = vld [vmem:[%s223 + $0x10] sm:$0xf]
        %v231 = vld [vmem:[%s223 + $0x14] sm:$0xf]
        %v232 = vld [vmem:[%s223 + $0x18] sm:$0xf]
        %v233 = vld [vmem:[%s223 + $0x1c] sm:$0xf]
        %v234 = vld [vmem:[%s223 + $0x20] sm:$0xf]
        %v235 = vld [vmem:[%s223 + $0x24] sm:$0xf]
        %v236 = vld [vmem:[%s223 + $0x28] sm:$0xf]
        %v237 = vld [vmem:[%s223 + $0x2c] sm:$0xf]
        %v238 = vld [vmem:[%s223 + $0x30] sm:$0xf]
        %v239 = vld [vmem:[%s223 + $0x34] sm:$0xf]
        %v240 = vld [vmem:[%s223 + $0x38] sm:$0xf]
        %v241 = vld [vmem:[%s223 + $0x3c] sm:$0xf]
        %v242 = vld [vmem:[%s1] sm:$0xf]
        %v243 = vld [vmem:[%s1 + $0x4] sm:$0xf]
        %v244 = vld [vmem:[%s1 + $0x8] sm:$0xf]
        %v245 = vld [vmem:[%s1 + $0xc] sm:$0xf]
        %v246 = vld [vmem:[%s2] sm:$0x1]
        %v248 = vperm.slane %v246, 0
        %v266 = vunpack.c.l.b16 %v226
        %v267 = vunpack.c.l.b16 %v227
        %v268 = vunpack.c.l.b16 %v228
        %v269 = vunpack.c.l.b16 %v229
        %v270 = vunpack.c.l.b16 %v230
        %v271 = vunpack.c.l.b16 %v231
        %v272 = vunpack.c.l.b16 %v232
        %v273 = vunpack.c.l.b16 %v233
        %v274 = vunpack.c.l.b16 %v234
        %v275 = vunpack.c.l.b16 %v235
        %v276 = vunpack.c.l.b16 %v236
        %v277 = vunpack.c.l.b16 %v237
        %v278 = vunpack.c.l.b16 %v238
        %v279 = vunpack.c.l.b16 %v239
        %v280 = vunpack.c.l.b16 %v240
        %v281 = vunpack.c.l.b16 %v241
        %v282 = vpack.c.b16 %v267, %v266
        %v283 = vpack.c.b16 %v269, %v268
        %v284 = vpack.c.b16 %v271, %v270
        %v285 = vpack.c.b16 %v273, %v272
        %v286 = vpack.c.b16 %v275, %v274
        %v287 = vpack.c.b16 %v277, %v276
        %v288 = vpack.c.b16 %v279, %v278
        %v289 = vpack.c.b16 %v281, %v280
        %v294 = vunpack.c.l.b16 %v242
        %v295 = vunpack.c.l.b16 %v243
        %v296 = vunpack.c.l.b16 %v244
        %v297 = vunpack.c.l.b16 %v245
        %v298 = vpack.c.b16 %v295, %v294
        %v299 = vpack.c.b16 %v297, %v296
        %vm302 = vcmask 261120
        %v304 = vsel %vm302, %v282, 0
        %v307 = vsel %vm302, %v283, 0
        %v310 = vsel %vm302, %v284, 0
        %v313 = vsel %vm302, %v285, 0
        %v316 = vsel %vm302, %v286, 0
        %v319 = vsel %vm302, %v287, 0
        %v322 = vsel %vm302, %v288, 0
        %v325 = vsel %vm302, %v289, 0
        %327 = vmatpush.bf16.msra.mxu0 0
        %328 = vmatpush.bf16.msra.mxu0 0
        %329 = vmatpush.bf16.msra.mxu0 0
        %330 = vmatpush.bf16.msra.mxu0 0
        %331 = vmatpush.bf16.msra.mxu0 0
        %332 = vmatpush.bf16.msra.mxu0 0
        %333 = vmatpush.bf16.msra.mxu0 %v299
        %334 = vmatpush.bf16.msra.mxu0 %v298
        %335 = vmatmul.bf16.gmra.mxu0 %v304
        %v336 = vpop.f32.mrf.mxu0
        %v337 = vadd.f32 %v248, %v336
        %v338 = vpop.f32.mrf.mxu0
        %v339 = vadd.f32 %v248, %v338
        %340 = vmatmul.bf16.gmra.mxu0 %v307
        %v341 = vpop.f32.mrf.mxu0
        %v342 = vadd.f32 %v248, %v341
        %v343 = vpop.f32.mrf.mxu0
        %v344 = vadd.f32 %v248, %v343
        %345 = vmatmul.bf16.gmra.mxu0 %v310
        %v346 = vpop.f32.mrf.mxu0
        %v347 = vadd.f32 %v248, %v346
        %v348 = vpop.f32.mrf.mxu0
        %v349 = vadd.f32 %v248, %v348
        %350 = vmatmul.bf16.gmra.mxu0 %v313
        %v351 = vpop.f32.mrf.mxu0
        %v352 = vadd.f32 %v248, %v351
        %v353 = vpop.f32.mrf.mxu0
        %v354 = vadd.f32 %v248, %v353
        %355 = vmatmul.bf16.gmra.mxu0 %v316
        %v356 = vpop.f32.mrf.mxu0
        %v357 = vadd.f32 %v248, %v356
        %v358 = vpop.f32.mrf.mxu0
        %v359 = vadd.f32 %v248, %v358
        %360 = vmatmul.bf16.gmra.mxu0 %v319
        %v361 = vpop.f32.mrf.mxu0
        %v362 = vadd.f32 %v248, %v361
        %v363 = vpop.f32.mrf.mxu0
        %v364 = vadd.f32 %v248, %v363
        %365 = vmatmul.bf16.gmra.mxu0 %v322
        %v366 = vpop.f32.mrf.mxu0
        %v367 = vadd.f32 %v248, %v366
        %v368 = vpop.f32.mrf.mxu0
        %v369 = vadd.f32 %v248, %v368
        %370 = vmatmul.bf16.gmra.mxu0 %v325
        %v371 = vpop.f32.mrf.mxu0
        %v372 = vadd.f32 %v248, %v371
        %v373 = vpop.f32.mrf.mxu0
        %v374 = vadd.f32 %v248, %v373
        %375 = vdwg.mxu0
        %v376 = vmax.f32 %v337, 0.0
        %v377 = vmax.f32 %v339, 0.0
        %v378 = vmax.f32 %v342, 0.0
        %v379 = vmax.f32 %v344, 0.0
        %v380 = vmax.f32 %v347, 0.0
        %v381 = vmax.f32 %v349, 0.0
        %v382 = vmax.f32 %v352, 0.0
        %v383 = vmax.f32 %v354, 0.0
        %v384 = vmax.f32 %v357, 0.0
        %v385 = vmax.f32 %v359, 0.0
        %v386 = vmax.f32 %v362, 0.0
        %v387 = vmax.f32 %v364, 0.0
        %v388 = vmax.f32 %v367, 0.0
        %v389 = vmax.f32 %v369, 0.0
        %v390 = vmax.f32 %v372, 0.0
        %v391 = vmax.f32 %v374, 0.0
        %v392 = vld [vmem:[%s3] sm:$0x1]
        %s393 = sld [smem:[#allocation2]]
        %v394 = vstv %s393
        %v396 = vsel %vm302, %v392, 0
        %v399 = vsel %vm302, %v376, 0
        %v402 = vsel %vm302, %v377, 0
        %v405 = vsel %vm302, %v378, 0
        %v408 = vsel %vm302, %v379, 0
        %v411 = vsel %vm302, %v380, 0
        %v414 = vsel %vm302, %v381, 0
        %v417 = vsel %vm302, %v382, 0
        %v420 = vsel %vm302, %v383, 0
        %v423 = vsel %vm302, %v384, 0
        %v426 = vsel %vm302, %v385, 0
        %v429 = vsel %vm302, %v386, 0
        %v432 = vsel %vm302, %v387, 0
        %v435 = vsel %vm302, %v388, 0
        %v438 = vsel %vm302, %v389, 0
        %v441 = vsel %vm302, %v390, 0
        %v444 = vsel %vm302, %v391, 0
        %446 = vmatpush.xpose.msra.mxu0 %v444
        %447 = vmatpush.xpose.msra.mxu0 %v441
        %448 = vmatpush.xpose.msra.mxu0 %v438
        %449 = vmatpush.xpose.msra.mxu0 %v435
        %450 = vmatpush.xpose.msra.mxu0 %v432
        %451 = vmatpush.xpose.msra.mxu0 %v429
        %452 = vmatpush.xpose.msra.mxu0 %v426
        %453 = vmatpush.xpose.msra.mxu0 %v423
        %454 = vmatpush.xpose.msra.mxu0 %v420
        %455 = vmatpush.xpose.msra.mxu0 %v417
        %456 = vmatpush.xpose.msra.mxu0 %v414
        %457 = vmatpush.xpose.msra.mxu0 %v411
        %458 = vmatpush.xpose.msra.mxu0 %v408
        %459 = vmatpush.xpose.msra.mxu0 %v405
        %460 = vmatpush.xpose.msra.mxu0 %v402
        %461 = vmatpush.xpose.msra.mxu0 %v399
        %462 = vmatmul.f32.gmra.mxu0 %v396
        %v463 = vpop.f32.mrf.mxu0
        %v464 = vadd.f32 %v394, %v463
        %465 = vdwg.mxu0
        %v466 = vsub.f32 0.0, %v464
        %v467 = vmul.f32 %v466, 1.442695
        %v468 = vpow.pop %v467
        %v469 = vadd.f32 %v468, 1.0
        %v470 = vrcp.pop %v469
        %471 = vst [vmem:[%s218] sm:$0x1] %v470
        %s472 = sand.u32 %s138, 1
        %s473 = scalar_lea.sflag [#allocation4], %s472
        %s474 = sand.u32 %s138, 1
        %s475 = scalar_lea.vmem [#allocation3], %s474
        // Predicated region
        $region41: #{tpu_custom_call.1} parent=39 // pred_check
          %p476 = pneg %p148
        $region42: #{tpu_custom_call.1} parent=39 // pred_check_branch
          %478 = sbr.rel (%p476) target = $region44
        $region43: #{tpu_custom_call.1} parent=39 // pred_region
          %480 = vsyncadd %s473, 0
          %s481 = scalar_lea.hbm %s5, %s20
          %s483 = sshll.u32 %s475, 4
          %s484 = int_to_ptr.vmem [resolvable:$true] %s483
          %s485 = sshll.u32 %s481, 4
          %s486 = int_to_ptr.hbm [resolvable:$true] %s485
          %488 = dma.vmem_to_hbm [thread:$0]  %s484, 16, %s486, %s473
        $region44: #{tpu_custom_call.1} parent=39 // pred_fallthru
          _
      $region40: #{tpu_custom_call.1} parent=5 // pred_fallthru
        _
      %p489 = scmp.le.s32.totalorder 2, %s15
      // Predicated region
      $region45: #{tpu_custom_call.1} parent=5 // pred_check
        %p490 = pneg %p489
      $region46: #{tpu_custom_call.1} parent=5 // pred_check_branch
        %492 = sbr.rel (%p490) target = $region48
      $region47: #{tpu_custom_call.1} parent=5 // pred_region
        %s493 = ssub.s32 %s15, 2
        // Predicated region
        $region49: #{tpu_custom_call.1} parent=47 // pred_check
          %p494 = pneg %p154
        $region50: #{tpu_custom_call.1} parent=47 // pred_check_branch
          %496 = sbr.rel (%p494) target = $region52
        $region51: #{tpu_custom_call.1} parent=47 // pred_region
          %s497 = sand.u32 %s139, 1
          %s498 = scalar_lea.sflag [#allocation4], %s497
          %s499 = sand.u32 %s139, 1
          %s500 = scalar_lea.vmem [#allocation3], %s499
          %502 = dma.done %s498, 16
        $region52: #{tpu_custom_call.1} parent=47 // pred_fallthru
          _
      $region48: #{tpu_custom_call.1} parent=5 // pred_fallthru
        _
    $region6: #{tpu_custom_call.1} parent=1 // loop_footer
      %s19 = sadd.s32 1, %s15
    $region7: #{tpu_custom_call.1} parent=1 // loop_footer_branch
      %14 = sbr.rel target = $region3
    $region8: #{tpu_custom_call.1} parent=1 // loop_exit
      _
    %503 = vsyncpa [#allocation4], 1
    %s504 = scalar_lea.sflag [#allocation4], 1
    %505 = vsyncpa %s504, 1

</llo_original>
